<compile_context>
chip_gen: v7x
topology: tpu7x:2x2x1
jax: 0.10.0
libtpu: 0.0.40
codegen_flags: <defaults>
</compile_context>

<pallas_src>
import math
import functools

import jax
import jax.numpy as jnp
from jax.experimental import pallas as pl
from jax.experimental.pallas import tpu as pltpu

# ----------------------------- config ---------------------------------------
B = 2            # batch
S = 16           # sequence length
H = 64           # hidden size
NH = 2           # num attention heads
DH = H // NH     # attention head size
LN_EPS = 1e-12   # BertLayerNorm epsilon


# ----------------------------- kernel ---------------------------------------
def bert_attention_kernel(x_ref, mask_ref, w_ref, vecs_ref, out_ref,
                          *, batch, seq, hidden, num_heads, head_dim, ln_eps):
    f32 = jnp.float32
    bf16 = jnp.bfloat16

    x = x_ref[...]            # (B*S, H)  f32
    mask = mask_ref[...]      # (B*S, S)  f32 additive attention mask
    w = w_ref[...]            # (2H, 3H)  bf16: rows 0:H = fused Wqkv, rows H:2H = Wo.T (lane-padded)
    vecs = vecs_ref[...]      # (4, 3H)   f32: bqkv / bo / gamma / beta (lane-padded)

    bqkv = vecs[0:1, :]                 # (1, 3H)   (Q part pre-scaled by 1/sqrt(DH))
    bo = vecs[1:2, :hidden]             # (1, H)
    gamma = vecs[2:3, :hidden]          # (1, H)
    beta = vecs[3:4, :hidden]           # (1, H)

    # ---- fused QKV projection: one (B*S, 3H) MXU matmul, bf16 in / f32 acc --
    qkv = jnp.dot(x.astype(bf16), w[0:hidden, :],
                  preferred_element_type=f32) + bqkv          # (B*S, 3H) f32

    k_base = num_heads * head_dim
    v_base = 2 * num_heads * head_dim

    # ---- scaled-dot-product attention, unrolled over (batch, head) ----------
    # Static row/lane slices feed the MXU directly (no stacked relayout).
    ctx = [[None] * batch for _ in range(num_heads)]
    for b in range(batch):
        rows = slice(b * seq, (b + 1) * seq)
        m_b = mask[rows, :]                                   # (S, S)
        for h in range(num_heads):
            cq = slice(h * head_dim, (h + 1) * head_dim)
            ck = slice(k_base + h * head_dim, k_base + (h + 1) * head_dim)
            cv = slice(v_base + h * head_dim, v_base + (h + 1) * head_dim)
            q = qkv[rows, cq].astype(bf16)                    # (S, DH), pre-scaled
            k = qkv[rows, ck].astype(bf16)                    # (S, DH)
            v = qkv[rows, cv].astype(bf16)                    # (S, DH)

            scores = jax.lax.dot_general(
                q, k, (((1,), (1,)), ((), ())),
                preferred_element_type=f32) + m_b             # (S, S) = q @ k.T + mask

            # numerically stable softmax in f32 (EUP exp + approx reciprocal)
            mmax = jnp.max(scores, axis=-1, keepdims=True)
            e = jnp.exp(scores - mmax)
            denom = jnp.sum(e, axis=-1, keepdims=True)
            probs = e * pl.reciprocal(denom, approx=True)

            ctx[h][b] = jnp.dot(probs.astype(bf16), v,
                                preferred_element_type=f32)   # (S, DH) f32

    # ---- output projection accumulated per head (no lane-axis head concat) --
    proj = bo                                                  # (1, H) broadcasts
    for h in range(num_heads):
        ctx_h = jnp.concatenate([ctx[h][b] for b in range(batch)],
                                axis=0)                        # (B*S, DH) sublane concat
        wo_h = w[hidden + h * head_dim: hidden + (h + 1) * head_dim,
                 0:hidden]                                     # (DH, H) bf16
        proj = proj + jnp.dot(ctx_h.astype(bf16), wo_h,
                              preferred_element_type=f32)      # (B*S, H)

    # ---- residual + LayerNorm (BertSelfOutput), f32 --------------------------
    r = proj + x
    mean = jnp.mean(r, axis=-1, keepdims=True)
    cen = r - mean
    var = jnp.mean(cen * cen, axis=-1, keepdims=True)
    y = cen * jax.lax.rsqrt(var + ln_eps)
    y = y * gamma + beta

    out_ref[...] = y.astype(out_ref.dtype)


# ----------------------------- wrapper ---------------------------------------
def bert_attention(hidden_states, attention_mask, params, *, num_heads=NH):
    """hidden_states: (B, S, H) f32; attention_mask: (B, 1, S, S) f32 additive."""
    Bsz, Ssz, Hsz = hidden_states.shape
    head_dim = Hsz // num_heads
    scale = 1.0 / math.sqrt(head_dim)

    # One-time parameter transforms (plain JAX glue, outside the kernel):
    #  - transpose nn.Linear weights to [in, out]
    #  - fold the 1/sqrt(head_dim) scale into the Q weight & bias
    #  - fuse Q/K/V into one (H, 3H) weight, stack Wo.T (lane-padded) below it
    #  - pack bqkv / bo / gamma / beta into a single (4, 3H) block
    wqkv = jnp.concatenate(
        [params["wq"].T * scale, params["wk"].T, params["wv"].T], axis=1)  # (H, 3H)
    wo_pad = jnp.pad(params["wo"].T, ((0, 0), (0, 2 * Hsz)))               # (H, 3H)
    w_all = jnp.concatenate([wqkv, wo_pad], axis=0).astype(jnp.bfloat16)   # (2H, 3H) bf16

    bqkv = jnp.concatenate([params["bq"] * scale, params["bk"], params["bv"]])
    vecs = jnp.zeros((4, 3 * Hsz), jnp.float32)
    vecs = vecs.at[0, :].set(bqkv)
    vecs = vecs.at[1, :Hsz].set(params["bo"])
    vecs = vecs.at[2, :Hsz].set(params["gamma"])
    vecs = vecs.at[3, :Hsz].set(params["beta"])

    x_flat = hidden_states.reshape(Bsz * Ssz, Hsz)         # contiguous, free
    mask_flat = attention_mask.reshape(Bsz * Ssz, Ssz)     # contiguous, free

    kernel = functools.partial(
        bert_attention_kernel,
        batch=Bsz, seq=Ssz, hidden=Hsz,
        num_heads=num_heads, head_dim=head_dim, ln_eps=LN_EPS)

    out_flat = pl.pallas_call(
        kernel,
        out_shape=jax.ShapeDtypeStruct((Bsz * Ssz, Hsz), hidden_states.dtype),
        in_specs=[
            pl.BlockSpec((Bsz * Ssz, Hsz), lambda: (0, 0)),      # x (flattened)
            pl.BlockSpec((Bsz * Ssz, Ssz), lambda: (0, 0)),      # mask (flattened)
            pl.BlockSpec((2 * Hsz, 3 * Hsz), lambda: (0, 0)),    # fused weights (bf16)
            pl.BlockSpec((4, 3 * Hsz), lambda: (0, 0)),          # packed vectors (f32)
        ],
        out_specs=pl.BlockSpec((Bsz * Ssz, Hsz), lambda: (0, 0)),
    )(x_flat, mask_flat, w_all, vecs)

    return out_flat.reshape(Bsz, Ssz, Hsz)


# ----------------------------- reference (pure JAX) --------------------------
def bert_attention_ref(x, mask, p):
    q = x @ p["wq"].T + p["bq"]
    k = x @ p["wk"].T + p["bk"]
    v = x @ p["wv"].T + p["bv"]

    def split(t):  # (B,S,H) -> (B,NH,S,DH)
        return t.reshape(B, S, NH, DH).transpose(0, 2, 1, 3)

    qh, kh, vh = split(q), split(k), split(v)
    scores = jnp.einsum("bhqd,bhkd->bhqk", qh / math.sqrt(DH), kh) + mask
    probs = jax.nn.softmax(scores, axis=-1)
    ctx = jnp.einsum("bhqk,bhkd->bhqd", probs, vh)
    ctx = ctx.transpose(0, 2, 1, 3).reshape(B, S, H)
    proj = ctx @ p["wo"].T + p["bo"]
    r = proj + x
    mean = jnp.mean(r, axis=-1, keepdims=True)
    var = jnp.mean((r - mean) ** 2, axis=-1, keepdims=True)
    return (r - mean) / jnp.sqrt(var + LN_EPS) * p["gamma"] + p["beta"]


# ----------------------------- main -------------------------------------------
if __name__ == "__main__":
    key = jax.random.PRNGKey(0)
    keys = jax.random.split(key, 12)

    def init(k, shape, scale=0.02):
        return (scale * jax.random.normal(k, shape)).astype(jnp.float32)

    params = {
        # nn.Linear weight convention: (out_features, in_features)
        "wq": init(keys[0], (H, H)), "bq": init(keys[1], (H,)),
        "wk": init(keys[2], (H, H)), "bk": init(keys[3], (H,)),
        "wv": init(keys[4], (H, H)), "bv": init(keys[5], (H,)),
        "wo": init(keys[6], (H, H)), "bo": init(keys[7], (H,)),
        "gamma": jnp.ones((H,), jnp.float32),
        "beta": jnp.zeros((H,), jnp.float32),
    }

    hidden_states = jax.random.normal(keys[8], (B, S, H), dtype=jnp.float32)
    # additive attention mask (0 for visible, -10000 for masked), shape (B,1,S,S)
    mask_bits = jax.random.bernoulli(keys[9], 0.9, (B, 1, S, S))
    attention_mask = jnp.where(mask_bits, 0.0, -10000.0).astype(jnp.float32)

    out = bert_attention(hidden_states, attention_mask, params)
    out = jax.block_until_ready(out)

    ref = bert_attention_ref(hidden_states, attention_mask, params)
    # Tolerance covers the bf16 MXU operands and the EUP approximate reciprocal
    # in the softmax denominator (expected error well under 1e-3 here).
    assert jnp.allclose(out, ref, atol=2e-3, rtol=2e-3), "mismatch vs JAX reference"

    print("KERNEL_OK")
</pallas_src>

<mosaic_0001>
module attributes {stable_mosaic.version = 11 : i64} {
  func.func @bert_attention_kernel(%arg0: memref<32x64xf32, #tpu.memory_space<vmem>>, %arg1: memref<32x16xf32, #tpu.memory_space<vmem>>, %arg2: memref<128x192xbf16, #tpu.memory_space<vmem>>, %arg3: memref<4x192xf32, #tpu.memory_space<vmem>>, %arg4: memref<32x64xf32, #tpu.memory_space<vmem>>) attributes {dimension_semantics = [], scalar_prefetch = 0 : i64, scratch_operands = 0 : i64, tpu.core_type = #tpu.core_type<tc>} {
    %c0 = arith.constant 0 : index
    %c0_0 = arith.constant 0 : index
    %0 = vector.load %arg0[%c0, %c0_0] : memref<32x64xf32, #tpu.memory_space<vmem>>, vector<32x64xf32>
    %c0_1 = arith.constant 0 : index
    %c0_2 = arith.constant 0 : index
    %1 = vector.load %arg1[%c0_1, %c0_2] : memref<32x16xf32, #tpu.memory_space<vmem>>, vector<32x16xf32>
    %c0_3 = arith.constant 0 : index
    %c0_4 = arith.constant 0 : index
    %2 = vector.load %arg2[%c0_3, %c0_4] : memref<128x192xbf16, #tpu.memory_space<vmem>>, vector<128x192xbf16>
    %c0_5 = arith.constant 0 : index
    %c0_6 = arith.constant 0 : index
    %3 = vector.load %arg3[%c0_5, %c0_6] : memref<4x192xf32, #tpu.memory_space<vmem>>, vector<4x192xf32>
    %4 = vector.extract_strided_slice %3 {offsets = [0, 0], sizes = [1, 192], strides = [1, 1]} : vector<4x192xf32> to vector<1x192xf32>
    %5 = vector.extract_strided_slice %3 {offsets = [1, 0], sizes = [1, 64], strides = [1, 1]} : vector<4x192xf32> to vector<1x64xf32>
    %6 = vector.extract_strided_slice %3 {offsets = [2, 0], sizes = [1, 64], strides = [1, 1]} : vector<4x192xf32> to vector<1x64xf32>
    %7 = vector.extract_strided_slice %3 {offsets = [3, 0], sizes = [1, 64], strides = [1, 1]} : vector<4x192xf32> to vector<1x64xf32>
    %8 = arith.truncf %0 : vector<32x64xf32> to vector<32x64xbf16>
    %9 = vector.extract_strided_slice %2 {offsets = [0, 0], sizes = [64, 192], strides = [1, 1]} : vector<128x192xbf16> to vector<64x192xbf16>
    %cst = arith.constant dense<0.000000e+00> : vector<32x192xf32>
    %10 = tpu.matmul %8, %9, %cst {dimension_numbers = #tpu.dot_dimension_numbers<[1], [0], [0], [1], [0, 0, 1, 1], [], []>} : vector<32x64xbf16>, vector<64x192xbf16>, vector<32x192xf32> -> vector<32x192xf32>
    %11 = vector.broadcast %4 : vector<1x192xf32> to vector<32x192xf32>
    %12 = arith.addf %10, %11 : vector<32x192xf32>
    %13 = vector.extract_strided_slice %1 {offsets = [0, 0], sizes = [16, 16], strides = [1, 1]} : vector<32x16xf32> to vector<16x16xf32>
    %14 = vector.extract_strided_slice %12 {offsets = [0, 0], sizes = [16, 32], strides = [1, 1]} : vector<32x192xf32> to vector<16x32xf32>
    %15 = arith.truncf %14 : vector<16x32xf32> to vector<16x32xbf16>
    %16 = vector.extract_strided_slice %12 {offsets = [0, 64], sizes = [16, 32], strides = [1, 1]} : vector<32x192xf32> to vector<16x32xf32>
    %17 = arith.truncf %16 : vector<16x32xf32> to vector<16x32xbf16>
    %18 = vector.extract_strided_slice %12 {offsets = [0, 128], sizes = [16, 32], strides = [1, 1]} : vector<32x192xf32> to vector<16x32xf32>
    %19 = arith.truncf %18 : vector<16x32xf32> to vector<16x32xbf16>
    %cst_7 = arith.constant dense<0.000000e+00> : vector<16x16xf32>
    %20 = tpu.matmul %15, %17, %cst_7 {dimension_numbers = #tpu.dot_dimension_numbers<[1], [1], [0], [0], [0, 0, 1, 0], [], []>} : vector<16x32xbf16>, vector<16x32xbf16>, vector<16x16xf32> -> vector<16x16xf32>
    %21 = arith.addf %20, %13 : vector<16x16xf32>
    %cst_8 = arith.constant dense<0xFF800000> : vector<16xf32>
    %22 = vector.multi_reduction <maximumf>, %21, %cst_8 [1] : vector<16x16xf32> to vector<16xf32>
    %23 = vector.shape_cast %22 : vector<16xf32> to vector<16x1xf32>
    %24 = vector.broadcast %23 : vector<16x1xf32> to vector<16x16xf32>
    %25 = arith.subf %21, %24 : vector<16x16xf32>
    %26 = math.exp %25 : vector<16x16xf32>
    %cst_9 = arith.constant dense<0.000000e+00> : vector<16xf32>
    %27 = vector.multi_reduction <add>, %26, %cst_9 [1] : vector<16x16xf32> to vector<16xf32>
    %28 = vector.shape_cast %27 : vector<16xf32> to vector<16x1xf32>
    %29 = tpu.reciprocal %28 {approx = true} : vector<16x1xf32> -> vector<16x1xf32>
    %30 = vector.broadcast %29 : vector<16x1xf32> to vector<16x16xf32>
    %31 = arith.mulf %26, %30 : vector<16x16xf32>
    %32 = arith.truncf %31 : vector<16x16xf32> to vector<16x16xbf16>
    %cst_10 = arith.constant dense<0.000000e+00> : vector<16x32xf32>
    %33 = tpu.matmul %32, %19, %cst_10 {dimension_numbers = #tpu.dot_dimension_numbers<[1], [0], [0], [1], [0, 0, 1, 1], [], []>} : vector<16x16xbf16>, vector<16x32xbf16>, vector<16x32xf32> -> vector<16x32xf32>
    %34 = vector.extract_strided_slice %12 {offsets = [0, 32], sizes = [16, 32], strides = [1, 1]} : vector<32x192xf32> to vector<16x32xf32>
    %35 = arith.truncf %34 : vector<16x32xf32> to vector<16x32xbf16>
    %36 = vector.extract_strided_slice %12 {offsets = [0, 96], sizes = [16, 32], strides = [1, 1]} : vector<32x192xf32> to vector<16x32xf32>
    %37 = arith.truncf %36 : vector<16x32xf32> to vector<16x32xbf16>
    %38 = vector.extract_strided_slice %12 {offsets = [0, 160], sizes = [16, 32], strides = [1, 1]} : vector<32x192xf32> to vector<16x32xf32>
    %39 = arith.truncf %38 : vector<16x32xf32> to vector<16x32xbf16>
    %cst_11 = arith.constant dense<0.000000e+00> : vector<16x16xf32>
    %40 = tpu.matmul %35, %37, %cst_11 {dimension_numbers = #tpu.dot_dimension_numbers<[1], [1], [0], [0], [0, 0, 1, 0], [], []>} : vector<16x32xbf16>, vector<16x32xbf16>, vector<16x16xf32> -> vector<16x16xf32>
    %41 = arith.addf %40, %13 : vector<16x16xf32>
    %cst_12 = arith.constant dense<0xFF800000> : vector<16xf32>
    %42 = vector.multi_reduction <maximumf>, %41, %cst_12 [1] : vector<16x16xf32> to vector<16xf32>
    %43 = vector.shape_cast %42 : vector<16xf32> to vector<16x1xf32>
    %44 = vector.broadcast %43 : vector<16x1xf32> to vector<16x16xf32>
    %45 = arith.subf %41, %44 : vector<16x16xf32>
    %46 = math.exp %45 : vector<16x16xf32>
    %cst_13 = arith.constant dense<0.000000e+00> : vector<16xf32>
    %47 = vector.multi_reduction <add>, %46, %cst_13 [1] : vector<16x16xf32> to vector<16xf32>
    %48 = vector.shape_cast %47 : vector<16xf32> to vector<16x1xf32>
    %49 = tpu.reciprocal %48 {approx = true} : vector<16x1xf32> -> vector<16x1xf32>
    %50 = vector.broadcast %49 : vector<16x1xf32> to vector<16x16xf32>
    %51 = arith.mulf %46, %50 : vector<16x16xf32>
    %52 = arith.truncf %51 : vector<16x16xf32> to vector<16x16xbf16>
    %cst_14 = arith.constant dense<0.000000e+00> : vector<16x32xf32>
    %53 = tpu.matmul %52, %39, %cst_14 {dimension_numbers = #tpu.dot_dimension_numbers<[1], [0], [0], [1], [0, 0, 1, 1], [], []>} : vector<16x16xbf16>, vector<16x32xbf16>, vector<16x32xf32> -> vector<16x32xf32>
    %54 = vector.extract_strided_slice %1 {offsets = [16, 0], sizes = [16, 16], strides = [1, 1]} : vector<32x16xf32> to vector<16x16xf32>
    %55 = vector.extract_strided_slice %12 {offsets = [16, 0], sizes = [16, 32], strides = [1, 1]} : vector<32x192xf32> to vector<16x32xf32>
    %56 = arith.truncf %55 : vector<16x32xf32> to vector<16x32xbf16>
    %57 = vector.extract_strided_slice %12 {offsets = [16, 64], sizes = [16, 32], strides = [1, 1]} : vector<32x192xf32> to vector<16x32xf32>
    %58 = arith.truncf %57 : vector<16x32xf32> to vector<16x32xbf16>
    %59 = vector.extract_strided_slice %12 {offsets = [16, 128], sizes = [16, 32], strides = [1, 1]} : vector<32x192xf32> to vector<16x32xf32>
    %60 = arith.truncf %59 : vector<16x32xf32> to vector<16x32xbf16>
    %cst_15 = arith.constant dense<0.000000e+00> : vector<16x16xf32>
    %61 = tpu.matmul %56, %58, %cst_15 {dimension_numbers = #tpu.dot_dimension_numbers<[1], [1], [0], [0], [0, 0, 1, 0], [], []>} : vector<16x32xbf16>, vector<16x32xbf16>, vector<16x16xf32> -> vector<16x16xf32>
    %62 = arith.addf %61, %54 : vector<16x16xf32>
    %cst_16 = arith.constant dense<0xFF800000> : vector<16xf32>
    %63 = vector.multi_reduction <maximumf>, %62, %cst_16 [1] : vector<16x16xf32> to vector<16xf32>
    %64 = vector.shape_cast %63 : vector<16xf32> to vector<16x1xf32>
    %65 = vector.broadcast %64 : vector<16x1xf32> to vector<16x16xf32>
    %66 = arith.subf %62, %65 : vector<16x16xf32>
    %67 = math.exp %66 : vector<16x16xf32>
    %cst_17 = arith.constant dense<0.000000e+00> : vector<16xf32>
    %68 = vector.multi_reduction <add>, %67, %cst_17 [1] : vector<16x16xf32> to vector<16xf32>
    %69 = vector.shape_cast %68 : vector<16xf32> to vector<16x1xf32>
    %70 = tpu.reciprocal %69 {approx = true} : vector<16x1xf32> -> vector<16x1xf32>
    %71 = vector.broadcast %70 : vector<16x1xf32> to vector<16x16xf32>
    %72 = arith.mulf %67, %71 : vector<16x16xf32>
    %73 = arith.truncf %72 : vector<16x16xf32> to vector<16x16xbf16>
    %cst_18 = arith.constant dense<0.000000e+00> : vector<16x32xf32>
    %74 = tpu.matmul %73, %60, %cst_18 {dimension_numbers = #tpu.dot_dimension_numbers<[1], [0], [0], [1], [0, 0, 1, 1], [], []>} : vector<16x16xbf16>, vector<16x32xbf16>, vector<16x32xf32> -> vector<16x32xf32>
    %75 = vector.extract_strided_slice %12 {offsets = [16, 32], sizes = [16, 32], strides = [1, 1]} : vector<32x192xf32> to vector<16x32xf32>
    %76 = arith.truncf %75 : vector<16x32xf32> to vector<16x32xbf16>
    %77 = vector.extract_strided_slice %12 {offsets = [16, 96], sizes = [16, 32], strides = [1, 1]} : vector<32x192xf32> to vector<16x32xf32>
    %78 = arith.truncf %77 : vector<16x32xf32> to vector<16x32xbf16>
    %79 = vector.extract_strided_slice %12 {offsets = [16, 160], sizes = [16, 32], strides = [1, 1]} : vector<32x192xf32> to vector<16x32xf32>
    %80 = arith.truncf %79 : vector<16x32xf32> to vector<16x32xbf16>
    %cst_19 = arith.constant dense<0.000000e+00> : vector<16x16xf32>
    %81 = tpu.matmul %76, %78, %cst_19 {dimension_numbers = #tpu.dot_dimension_numbers<[1], [1], [0], [0], [0, 0, 1, 0], [], []>} : vector<16x32xbf16>, vector<16x32xbf16>, vector<16x16xf32> -> vector<16x16xf32>
    %82 = arith.addf %81, %54 : vector<16x16xf32>
    %cst_20 = arith.constant dense<0xFF800000> : vector<16xf32>
    %83 = vector.multi_reduction <maximumf>, %82, %cst_20 [1] : vector<16x16xf32> to vector<16xf32>
    %84 = vector.shape_cast %83 : vector<16xf32> to vector<16x1xf32>
    %85 = vector.broadcast %84 : vector<16x1xf32> to vector<16x16xf32>
    %86 = arith.subf %82, %85 : vector<16x16xf32>
    %87 = math.exp %86 : vector<16x16xf32>
    %cst_21 = arith.constant dense<0.000000e+00> : vector<16xf32>
    %88 = vector.multi_reduction <add>, %87, %cst_21 [1] : vector<16x16xf32> to vector<16xf32>
    %89 = vector.shape_cast %88 : vector<16xf32> to vector<16x1xf32>
    %90 = tpu.reciprocal %89 {approx = true} : vector<16x1xf32> -> vector<16x1xf32>
    %91 = vector.broadcast %90 : vector<16x1xf32> to vector<16x16xf32>
    %92 = arith.mulf %87, %91 : vector<16x16xf32>
    %93 = arith.truncf %92 : vector<16x16xf32> to vector<16x16xbf16>
    %cst_22 = arith.constant dense<0.000000e+00> : vector<16x32xf32>
    %94 = tpu.matmul %93, %80, %cst_22 {dimension_numbers = #tpu.dot_dimension_numbers<[1], [0], [0], [1], [0, 0, 1, 1], [], []>} : vector<16x16xbf16>, vector<16x32xbf16>, vector<16x32xf32> -> vector<16x32xf32>
    %95 = tpu.concatenate %33, %74 in 0 : vector<16x32xf32>, vector<16x32xf32> -> vector<32x32xf32>
    %96 = vector.extract_strided_slice %2 {offsets = [64, 0], sizes = [32, 64], strides = [1, 1]} : vector<128x192xbf16> to vector<32x64xbf16>
    %97 = arith.truncf %95 : vector<32x32xf32> to vector<32x32xbf16>
    %cst_23 = arith.constant dense<0.000000e+00> : vector<32x64xf32>
    %98 = tpu.matmul %97, %96, %cst_23 {dimension_numbers = #tpu.dot_dimension_numbers<[1], [0], [0], [1], [0, 0, 1, 1], [], []>} : vector<32x32xbf16>, vector<32x64xbf16>, vector<32x64xf32> -> vector<32x64xf32>
    %99 = vector.broadcast %5 : vector<1x64xf32> to vector<32x64xf32>
    %100 = arith.addf %99, %98 : vector<32x64xf32>
    %101 = tpu.concatenate %53, %94 in 0 : vector<16x32xf32>, vector<16x32xf32> -> vector<32x32xf32>
    %102 = vector.extract_strided_slice %2 {offsets = [96, 0], sizes = [32, 64], strides = [1, 1]} : vector<128x192xbf16> to vector<32x64xbf16>
    %103 = arith.truncf %101 : vector<32x32xf32> to vector<32x32xbf16>
    %cst_24 = arith.constant dense<0.000000e+00> : vector<32x64xf32>
    %104 = tpu.matmul %103, %102, %cst_24 {dimension_numbers = #tpu.dot_dimension_numbers<[1], [0], [0], [1], [0, 0, 1, 1], [], []>} : vector<32x32xbf16>, vector<32x64xbf16>, vector<32x64xf32> -> vector<32x64xf32>
    %105 = arith.addf %100, %104 : vector<32x64xf32>
    %106 = arith.addf %105, %0 : vector<32x64xf32>
    %cst_25 = arith.constant dense<0.000000e+00> : vector<32xf32>
    %107 = vector.multi_reduction <add>, %106, %cst_25 [1] : vector<32x64xf32> to vector<32xf32>
    %108 = vector.shape_cast %107 : vector<32xf32> to vector<32x1xf32>
    %cst_26 = arith.constant 6.400000e+01 : f32
    %109 = vector.broadcast %cst_26 : f32 to vector<32x1xf32>
    %110 = arith.divf %108, %109 : vector<32x1xf32>
    %111 = vector.broadcast %110 : vector<32x1xf32> to vector<32x64xf32>
    %112 = arith.subf %106, %111 : vector<32x64xf32>
    %113 = arith.mulf %112, %112 : vector<32x64xf32>
    %cst_27 = arith.constant dense<0.000000e+00> : vector<32xf32>
    %114 = vector.multi_reduction <add>, %113, %cst_27 [1] : vector<32x64xf32> to vector<32xf32>
    %115 = vector.shape_cast %114 : vector<32xf32> to vector<32x1xf32>
    %cst_28 = arith.constant 6.400000e+01 : f32
    %116 = vector.broadcast %cst_28 : f32 to vector<32x1xf32>
    %117 = arith.divf %115, %116 : vector<32x1xf32>
    %cst_29 = arith.constant 9.99999996E-13 : f32
    %118 = vector.broadcast %cst_29 : f32 to vector<32x1xf32>
    %119 = arith.addf %117, %118 : vector<32x1xf32>
    %120 = math.rsqrt %119 : vector<32x1xf32>
    %121 = vector.broadcast %120 : vector<32x1xf32> to vector<32x64xf32>
    %122 = arith.mulf %112, %121 : vector<32x64xf32>
    %123 = vector.broadcast %6 : vector<1x64xf32> to vector<32x64xf32>
    %124 = arith.mulf %122, %123 : vector<32x64xf32>
    %125 = vector.broadcast %7 : vector<1x64xf32> to vector<32x64xf32>
    %126 = arith.addf %124, %125 : vector<32x64xf32>
    %c0_30 = arith.constant 0 : index
    %c0_31 = arith.constant 0 : index
    %127 = vector.load %arg4[%c0_30, %c0_31] : memref<32x64xf32, #tpu.memory_space<vmem>>, vector<32x64xf32>
    tpu.vector_store %arg4[%c0_30, %c0_31], %126 {strides = array<i32>} : memref<32x64xf32, #tpu.memory_space<vmem>>, vector<32x64xf32>,
    return
  }
}

</mosaic_0001>

<llo_original>
// kernel: tpu_custom_call.1
$region0: #{tpu_custom_call.1}
  #allocation0 [shape = 'u32[]', space=smem, size = 0x4, offset = 0x4, fixed_abs, tag = 'smem constant byte address 0x4 - core index']
  #allocation1 [shape = 'u32[144,128]{1,0:T(1,128)}', space=vmem, size = 0x12000, scoped, tag = 'internal scratch']
  %s0 = inlined_call_operand.vmem [shape: f32[32,64], index: 0, kind: input, shape index: {}]
  %s1 = inlined_call_operand.vmem [shape: f32[32,16], index: 1, kind: input, shape index: {}]
  %s2 = inlined_call_operand.vmem [shape: bf16[128,192], index: 2, kind: input, shape index: {}]
  %s3 = inlined_call_operand.vmem [shape: f32[4,192], index: 3, kind: input, shape index: {}]
  %s4 = inlined_call_operand.hbm [shape: f32[32,64], index: 4, kind: output, shape index: {}]
  %s5 = sld [smem:[#allocation0]]
  $region26: #{tpu_custom_call.1} parent=0
    _
  %s7 = ssub.s32 1, %s5
  %s8 = scalar_select 0, %s7, %s5
  $region1: #{tpu_custom_call.1} parent=0
    #allocation2 [shape = 'u8[16384]{0}', space=vmem, size = 0x4000, scoped, tag = 'output window, operand 0, single buffered']
    #allocation3 [shape = 's32[1]{0}', space=sflag, size = 0x4, scoped, tag = 'scoped memory for tpu_custom_call.1']
    %9 = vsyncpa [#allocation3], 0
    // Predicated region
    $region2: #{tpu_custom_call.1} parent=1 // pred_check
      _
    $region3: #{tpu_custom_call.1} parent=1 // pred_check_branch
      %11 = sbr.rel (0) target = $region5
    $region4: #{tpu_custom_call.1} parent=1 // pred_region
      _
    $region5: #{tpu_custom_call.1} parent=1 // pred_fallthru
      _
    // Predicated region
    $region6: #{tpu_custom_call.1} parent=1 // pred_check
      _
    $region7: #{tpu_custom_call.1} parent=1 // pred_check_branch
      %13 = sbr.rel (0) target = $region9
    $region8: #{tpu_custom_call.1} parent=1 // pred_region
      _
    $region9: #{tpu_custom_call.1} parent=1 // pred_fallthru
      _
    // Predicated region
    $region10: #{tpu_custom_call.1} parent=1 // pred_check
      _
    $region11: #{tpu_custom_call.1} parent=1 // pred_check_branch
      %15 = sbr.rel (0) target = $region13
    $region12: #{tpu_custom_call.1} parent=1 // pred_region
      _
    $region13: #{tpu_custom_call.1} parent=1 // pred_fallthru
      _
    // Predicated region
    $region14: #{tpu_custom_call.1} parent=1 // pred_check
      _
    $region15: #{tpu_custom_call.1} parent=1 // pred_check_branch
      %17 = sbr.rel (0) target = $region17
    $region16: #{tpu_custom_call.1} parent=1 // pred_region
      _
    $region17: #{tpu_custom_call.1} parent=1 // pred_fallthru
      _
    %v19 = vld [vmem:[%s0] sm:$0xff]
    %v20 = vld [vmem:[%s0 + $0x8] sm:$0xff]
    %v21 = vld [vmem:[%s0 + $0x10] sm:$0xff]
    %v22 = vld [vmem:[%s0 + $0x18] sm:$0xff]
    %v23 = vld [vmem:[%s1] sm:$0xff]
    %v24 = vld [vmem:[%s1 + $0x8] sm:$0xff]
    %v25 = vld [vmem:[%s1 + $0x10] sm:$0xff]
    %v26 = vld [vmem:[%s1 + $0x18] sm:$0xff]
    %v27 = vld [vmem:[%s2] sm:$0xff]
    %v28 = vld [vmem:[%s2 + $0x8] sm:$0xff]
    %v29 = vld [vmem:[%s2 + $0x10] sm:$0xff]
    %v30 = vld [vmem:[%s2 + $0x18] sm:$0xff]
    %v31 = vld [vmem:[%s2 + $0x20] sm:$0xff]
    %v32 = vld [vmem:[%s2 + $0x28] sm:$0xff]
    %v33 = vld [vmem:[%s2 + $0x30] sm:$0xff]
    %v34 = vld [vmem:[%s2 + $0x38] sm:$0xff]
    %v35 = vld [vmem:[%s2 + $0x40] sm:$0xff]
    %v36 = vld [vmem:[%s2 + $0x48] sm:$0xff]
    %v37 = vld [vmem:[%s2 + $0x50] sm:$0xff]
    %v38 = vld [vmem:[%s2 + $0x58] sm:$0xff]
    %v39 = vld [vmem:[%s2 + $0x60] sm:$0xff]
    %v40 = vld [vmem:[%s2 + $0x68] sm:$0xff]
    %v41 = vld [vmem:[%s2 + $0x70] sm:$0xff]
    %v42 = vld [vmem:[%s2 + $0x78] sm:$0xff]
    %v43 = vld [vmem:[%s3] sm:$0xff]
    %v44 = vpack.c.bf16 %v20, %v19
    %v45 = vpack.c.bf16 %v22, %v21
    %v47 = vlaneseq
    %v48 = vshrl.u32 %v47, 7
    %v49 = vsub.s32 0, %v48
    %v50 = vrot.slane %v43, %v49
    %v51 = vlaneseq
    %v52 = vshrl.u32 %v51, 7
    %v53 = vsub.s32 4, %v52
    %v54 = vrot.slane %v43, %v53
    %v57 = vlaneseq
    %v58 = vshrl.u32 %v57, 7
    %v59 = vsub.s32 0, %v58
    %v60 = vrot.slane %v50, %v59
    %v61 = vlaneseq
    %v62 = vshrl.u32 %v61, 7
    %v63 = vsub.s32 0, %v62
    %v64 = vrot.slane %v54, %v63
    %v73 = vunpack.c.l.b16 %v27
    %v74 = vunpack.c.h.b16 %v27
    %v75 = vunpack.c.l.b16 %v28
    %v76 = vunpack.c.h.b16 %v28
    %v77 = vunpack.c.l.b16 %v29
    %v78 = vunpack.c.h.b16 %v29
    %v79 = vunpack.c.l.b16 %v30
    %v80 = vunpack.c.h.b16 %v30
    %v81 = vunpack.c.l.b16 %v31
    %v82 = vunpack.c.h.b16 %v31
    %v83 = vunpack.c.l.b16 %v32
    %v84 = vunpack.c.h.b16 %v32
    %v85 = vunpack.c.l.b16 %v33
    %v86 = vunpack.c.h.b16 %v33
    %v87 = vunpack.c.l.b16 %v34
    %v88 = vunpack.c.h.b16 %v34
    %v89 = vpack.c.b16 %v75, %v73
    %v90 = vpack.c.b16 %v76, %v74
    %v91 = vpack.c.b16 %v79, %v77
    %v92 = vpack.c.b16 %v80, %v78
    %v93 = vpack.c.b16 %v83, %v81
    %v94 = vpack.c.b16 %v84, %v82
    %v95 = vpack.c.b16 %v87, %v85
    %v96 = vpack.c.b16 %v88, %v86
    %vm105 = vcmask 523264
    %v107 = vsel %vm105, %v44, 0
    %v110 = vsel %vm105, %v45, 0
    %112 = vmatprep.subr.bf16.mxu0 %v90
    %113 = vmatpush1.bf16.msra.mxu0 %v89
    %114 = vmatprep.subr.bf16.mxu0 %v92
    %115 = vmatpush1.bf16.msra.mxu0 %v91
    %116 = vmatprep.subr.bf16.mxu0 %v94
    %117 = vmatpush1.bf16.msra.mxu0 %v93
    %118 = vmatprep.subr.bf16.mxu0 %v96
    %119 = vmatpush1.bf16.msra.mxu0 %v95
    %120 = vmatprep.subr.bf16.mxu0 0
    %121 = vmatpush1.bf16.msra.mxu0 0
    %122 = vmatprep.subr.bf16.mxu0 0
    %123 = vmatpush1.bf16.msra.mxu0 0
    %124 = vmatprep.subr.bf16.mxu0 0
    %125 = vmatpush1.bf16.msra.mxu0 0
    %126 = vmatprep.subr.bf16.mxu0 0
    %127 = vmatpush1.bf16.msra.mxu0 0
    %128 = vmatprep.subr.bf16.mxu0 0
    %129 = vmatpush1.bf16.msra.mxu0 0
    %130 = vmatprep.subr.bf16.mxu0 0
    %131 = vmatpush1.bf16.msra.mxu0 0
    %132 = vmatprep.subr.bf16.mxu0 0
    %133 = vmatpush1.bf16.msra.mxu0 0
    %134 = vmatprep.subr.bf16.mxu0 0
    %135 = vmatpush1.bf16.msra.mxu0 0
    %136 = vmatprep.subr.bf16.mxu0 0
    %137 = vmatpush1.bf16.msra.mxu0 0
    %138 = vmatprep.subr.bf16.mxu0 0
    %139 = vmatpush1.bf16.msra.mxu0 0
    %140 = vmatprep.subr.bf16.mxu0 0
    %141 = vmatpush1.bf16.msra.mxu0 0
    %142 = vmatprep.subr.bf16.mxu0 0
    %143 = vmatpush1.bf16.msra.mxu0 0
    %144 = vmatprep.mubr.bf16.mxu0 0
    %145 = vmatmul.mubr.bf16.gmra.mrb[0].mxu0 %v107
    %v146 = vpop.f32.mrb[0].mxu0
    %v147 = vadd.f32 %v60, %v146
    %v148 = vpop.f32.mrb[0].mxu0
    %v149 = vadd.f32 %v64, %v148
    %v150 = vpop.f32.mrb[0].mxu0
    %v151 = vadd.f32 %v60, %v150
    %v152 = vpop.f32.mrb[0].mxu0
    %v153 = vadd.f32 %v64, %v152
    %154 = vmatprep.mubr.bf16.mxu0 0
    %155 = vmatmul.mubr.bf16.gmra.mrb[0].mxu0 %v110
    %v156 = vpop.f32.mrb[0].mxu0
    %v157 = vadd.f32 %v60, %v156
    %v158 = vpop.f32.mrb[0].mxu0
    %v159 = vadd.f32 %v64, %v158
    %v160 = vpop.f32.mrb[0].mxu0
    %v161 = vadd.f32 %v60, %v160
    %v162 = vpop.f32.mrb[0].mxu0
    %v163 = vadd.f32 %v64, %v162
    %164 = vdwg.mxu0
    %v165 = vpack.c.bf16 %v151, %v147
    %v166 = vpack.c.bf16 %v153, %v149
    %168 = vrot.lane.b32.xlu0 %v165, 64
    %v169 = vpop.permute.xlu0 %168
    %vm170 = vcmask 261120
    %v172 = vsel %vm170, %v165, 0
    %v175 = vsel %vm170, %v169, 0
    %177 = vmatprep.subr.bf16.mxu0 0
    %178 = vmatpush1.bf16.xpose.msra.mxu0 %v175
    %179 = vmatprep.subr.bf16.mxu0 0
    %180 = vmatpush1.bf16.xpose.msra.mxu0 0
    %181 = vmatprep.subr.bf16.mxu0 0
    %182 = vmatpush1.bf16.xpose.msra.mxu0 0
    %183 = vmatprep.subr.bf16.mxu0 0
    %184 = vmatpush1.bf16.xpose.msra.mxu0 0
    %185 = vmatprep.subr.bf16.mxu0 0
    %186 = vmatpush1.bf16.xpose.msra.mxu0 0
    %187 = vmatprep.subr.bf16.mxu0 0
    %188 = vmatpush1.bf16.xpose.msra.mxu0 0
    %189 = vmatprep.subr.bf16.mxu0 0
    %190 = vmatpush1.bf16.xpose.msra.mxu0 0
    %191 = vmatprep.subr.bf16.mxu0 0
    %192 = vmatpush1.bf16.xpose.msra.mxu0 0
    %193 = vmatprep.subr.bf16.mxu0 0
    %194 = vmatpush1.bf16.xpose.msra.mxu0 0
    %195 = vmatprep.subr.bf16.mxu0 0
    %196 = vmatpush1.bf16.xpose.msra.mxu0 0
    %197 = vmatprep.subr.bf16.mxu0 0
    %198 = vmatpush1.bf16.xpose.msra.mxu0 0
    %199 = vmatprep.subr.bf16.mxu0 0
    %200 = vmatpush1.bf16.xpose.msra.mxu0 0
    %201 = vmatprep.subr.bf16.mxu0 0
    %202 = vmatpush1.bf16.xpose.msra.mxu0 0
    %203 = vmatprep.subr.bf16.mxu0 0
    %204 = vmatpush1.bf16.xpose.msra.mxu0 0
    %205 = vmatprep.subr.bf16.mxu0 0
    %206 = vmatpush1.bf16.xpose.msra.mxu0 0
    %207 = vmatprep.subr.bf16.mxu0 0
    %208 = vmatpush1.bf16.xpose.msra.mxu0 0
    %209 = vmatprep.mubr.bf16.mxu0 0
    %210 = vmatmul.mubr.bf16.gmra.mrb[0].mxu0 %v172
    %v211 = vpop.f32.mrb[0].mxu0
    %v212 = vadd.f32 %v23, %v211
    %v213 = vpop.f32.mrb[0].mxu0
    %v214 = vpop.f32.mrb[0].mxu0
    %v215 = vadd.f32 %v24, %v214
    %v216 = vpop.f32.mrb[0].mxu0
    %217 = vdwg.mxu0
    %vm218 = vcmask 130048
    %v219 = vsel %vm218, %v212, -inf
    %220 = vmax.xlane.f32.xlu0 %v219
    %v221 = vpop.xlane.xlu0 %220
    %v222 = vsel %vm218, %v215, -inf
    %223 = vmax.xlane.f32.xlu0 %v222
    %v224 = vpop.xlane.xlu0 %223
    %v225 = vsub.f32 %v212, %v221
    %v226 = vsub.f32 %v215, %v224
    %v227 = vmul.f32 %v225, 1.442695
    %v228 = vpow.pop %v227
    %v229 = vmul.f32 %v226, 1.442695
    %v230 = vpow.pop %v229
    %v231 = vsel %vm218, %v228, 0.0
    %232 = vadd.xlane.f32.xlu0 %v231
    %v233 = vpop.xlane.xlu0 %232
    %v234 = vsel %vm218, %v230, 0.0
    %235 = vadd.xlane.f32.xlu0 %v234
    %v236 = vpop.xlane.xlu0 %235
    %v237 = vrcp.pop %v233
    %v238 = vrcp.pop %v236
    %v239 = vmul.f32 %v228, %v237
    %v240 = vmul.f32 %v230, %v238
    %v241 = vpack.c.bf16 %v240, %v239
    %v243 = vsel %vm218, %v241, 0
    %245 = vmatprep.subr.bf16.mxu0 0
    %246 = vmatpush1.bf16.msra.mxu0 %v166
    %247 = vmatprep.subr.bf16.mxu0 0
    %248 = vmatpush1.bf16.msra.mxu0 0
    %249 = vmatprep.subr.bf16.mxu0 0
    %250 = vmatpush1.bf16.msra.mxu0 0
    %251 = vmatprep.subr.bf16.mxu0 0
    %252 = vmatpush1.bf16.msra.mxu0 0
    %253 = vmatprep.subr.bf16.mxu0 0
    %254 = vmatpush1.bf16.msra.mxu0 0
    %255 = vmatprep.subr.bf16.mxu0 0
    %256 = vmatpush1.bf16.msra.mxu0 0
    %257 = vmatprep.subr.bf16.mxu0 0
    %258 = vmatpush1.bf16.msra.mxu0 0
    %259 = vmatprep.subr.bf16.mxu0 0
    %260 = vmatpush1.bf16.msra.mxu0 0
    %261 = vmatprep.subr.bf16.mxu0 0
    %262 = vmatpush1.bf16.msra.mxu0 0
    %263 = vmatprep.subr.bf16.mxu0 0
    %264 = vmatpush1.bf16.msra.mxu0 0
    %265 = vmatprep.subr.bf16.mxu0 0
    %266 = vmatpush1.bf16.msra.mxu0 0
    %267 = vmatprep.subr.bf16.mxu0 0
    %268 = vmatpush1.bf16.msra.mxu0 0
    %269 = vmatprep.subr.bf16.mxu0 0
    %270 = vmatpush1.bf16.msra.mxu0 0
    %271 = vmatprep.subr.bf16.mxu0 0
    %272 = vmatpush1.bf16.msra.mxu0 0
    %273 = vmatprep.subr.bf16.mxu0 0
    %274 = vmatpush1.bf16.msra.mxu0 0
    %275 = vmatprep.subr.bf16.mxu0 0
    %276 = vmatpush1.bf16.msra.mxu0 0
    %277 = vmatprep.mubr.bf16.mxu0 0
    %278 = vmatmul.mubr.bf16.gmra.mrb[0].mxu0 %v243
    %v279 = vpop.f32.mrb[0].mxu0
    %v280 = vadd.f32 0.0, %v279
    %v281 = vpop.f32.mrb[0].mxu0
    %v282 = vpop.f32.mrb[0].mxu0
    %v283 = vadd.f32 0.0, %v282
    %v284 = vpop.f32.mrb[0].mxu0
    %285 = vdwg.mxu0
    %286 = vrot.lane.b32.xlu0 %v165, 96
    %v287 = vpop.permute.xlu0 %286
    %288 = vrot.lane.b32.xlu0 %v165, 32
    %v289 = vpop.permute.xlu0 %288
    %v291 = vsel %vm170, %v287, 0
    %v294 = vsel %vm170, %v289, 0
    %296 = vmatprep.subr.bf16.mxu0 0
    %297 = vmatpush1.bf16.xpose.msra.mxu0 %v294
    %298 = vmatprep.subr.bf16.mxu0 0
    %299 = vmatpush1.bf16.xpose.msra.mxu0 0
    %300 = vmatprep.subr.bf16.mxu0 0
    %301 = vmatpush1.bf16.xpose.msra.mxu0 0
    %302 = vmatprep.subr.bf16.mxu0 0
    %303 = vmatpush1.bf16.xpose.msra.mxu0 0
    %304 = vmatprep.subr.bf16.mxu0 0
    %305 = vmatpush1.bf16.xpose.msra.mxu0 0
    %306 = vmatprep.subr.bf16.mxu0 0
    %307 = vmatpush1.bf16.xpose.msra.mxu0 0
    %308 = vmatprep.subr.bf16.mxu0 0
    %309 = vmatpush1.bf16.xpose.msra.mxu0 0
    %310 = vmatprep.subr.bf16.mxu0 0
    %311 = vmatpush1.bf16.xpose.msra.mxu0 0
    %312 = vmatprep.subr.bf16.mxu0 0
    %313 = vmatpush1.bf16.xpose.msra.mxu0 0
    %314 = vmatprep.subr.bf16.mxu0 0
    %315 = vmatpush1.bf16.xpose.msra.mxu0 0
    %316 = vmatprep.subr.bf16.mxu0 0
    %317 = vmatpush1.bf16.xpose.msra.mxu0 0
    %318 = vmatprep.subr.bf16.mxu0 0
    %319 = vmatpush1.bf16.xpose.msra.mxu0 0
    %320 = vmatprep.subr.bf16.mxu0 0
    %321 = vmatpush1.bf16.xpose.msra.mxu0 0
    %322 = vmatprep.subr.bf16.mxu0 0
    %323 = vmatpush1.bf16.xpose.msra.mxu0 0
    %324 = vmatprep.subr.bf16.mxu0 0
    %325 = vmatpush1.bf16.xpose.msra.mxu0 0
    %326 = vmatprep.subr.bf16.mxu0 0
    %327 = vmatpush1.bf16.xpose.msra.mxu0 0
    %328 = vmatprep.mubr.bf16.mxu0 0
    %329 = vmatmul.mubr.bf16.gmra.mrb[0].mxu0 %v291
    %v330 = vpop.f32.mrb[0].mxu0
    %v331 = vadd.f32 %v23, %v330
    %v332 = vpop.f32.mrb[0].mxu0
    %v333 = vpop.f32.mrb[0].mxu0
    %v334 = vadd.f32 %v24, %v333
    %v335 = vpop.f32.mrb[0].mxu0
    %336 = vdwg.mxu0
    %v337 = vsel %vm218, %v331, -inf
    %338 = vmax.xlane.f32.xlu0 %v337
    %v339 = vpop.xlane.xlu0 %338
    %v340 = vsel %vm218, %v334, -inf
    %341 = vmax.xlane.f32.xlu0 %v340
    %v342 = vpop.xlane.xlu0 %341
    %v343 = vsub.f32 %v331, %v339
    %v344 = vsub.f32 %v334, %v342
    %v345 = vmul.f32 %v343, 1.442695
    %v346 = vpow.pop %v345
    %v347 = vmul.f32 %v344, 1.442695
    %v348 = vpow.pop %v347
    %v349 = vsel %vm218, %v346, 0.0
    %350 = vadd.xlane.f32.xlu0 %v349
    %v351 = vpop.xlane.xlu0 %350
    %v352 = vsel %vm218, %v348, 0.0
    %353 = vadd.xlane.f32.xlu0 %v352
    %v354 = vpop.xlane.xlu0 %353
    %v355 = vrcp.pop %v351
    %v356 = vrcp.pop %v354
    %v357 = vmul.f32 %v346, %v355
    %v358 = vmul.f32 %v348, %v356
    %v359 = vpack.c.bf16 %v358, %v357
    %361 = vrot.lane.b32.xlu0 %v166, 96
    %v362 = vpop.permute.xlu0 %361
    %v365 = vsel %vm218, %v359, 0
    %367 = vmatprep.subr.bf16.mxu0 0
    %368 = vmatpush1.bf16.msra.mxu0 %v362
    %369 = vmatprep.subr.bf16.mxu0 0
    %370 = vmatpush1.bf16.msra.mxu0 0
    %371 = vmatprep.subr.bf16.mxu0 0
    %372 = vmatpush1.bf16.msra.mxu0 0
    %373 = vmatprep.subr.bf16.mxu0 0
    %374 = vmatpush1.bf16.msra.mxu0 0
    %375 = vmatprep.subr.bf16.mxu0 0
    %376 = vmatpush1.bf16.msra.mxu0 0
    %377 = vmatprep.subr.bf16.mxu0 0
    %378 = vmatpush1.bf16.msra.mxu0 0
    %379 = vmatprep.subr.bf16.mxu0 0
    %380 = vmatpush1.bf16.msra.mxu0 0
    %381 = vmatprep.subr.bf16.mxu0 0
    %382 = vmatpush1.bf16.msra.mxu0 0
    %383 = vmatprep.subr.bf16.mxu0 0
    %384 = vmatpush1.bf16.msra.mxu0 0
    %385 = vmatprep.subr.bf16.mxu0 0
    %386 = vmatpush1.bf16.msra.mxu0 0
    %387 = vmatprep.subr.bf16.mxu0 0
    %388 = vmatpush1.bf16.msra.mxu0 0
    %389 = vmatprep.subr.bf16.mxu0 0
    %390 = vmatpush1.bf16.msra.mxu0 0
    %391 = vmatprep.subr.bf16.mxu0 0
    %392 = vmatpush1.bf16.msra.mxu0 0
    %393 = vmatprep.subr.bf16.mxu0 0
    %394 = vmatpush1.bf16.msra.mxu0 0
    %395 = vmatprep.subr.bf16.mxu0 0
    %396 = vmatpush1.bf16.msra.mxu0 0
    %397 = vmatprep.subr.bf16.mxu0 0
    %398 = vmatpush1.bf16.msra.mxu0 0
    %399 = vmatprep.mubr.bf16.mxu0 0
    %400 = vmatmul.mubr.bf16.gmra.mrb[0].mxu0 %v365
    %v401 = vpop.f32.mrb[0].mxu0
    %v402 = vadd.f32 0.0, %v401
    %v403 = vpop.f32.mrb[0].mxu0
    %v404 = vpop.f32.mrb[0].mxu0
    %v405 = vadd.f32 0.0, %v404
    %v406 = vpop.f32.mrb[0].mxu0
    %407 = vdwg.mxu0
    %v408 = vpack.c.bf16 %v161, %v157
    %v409 = vpack.c.bf16 %v163, %v159
    %411 = vrot.lane.b32.xlu0 %v408, 64
    %v412 = vpop.permute.xlu0 %411
    %v414 = vsel %vm170, %v408, 0
    %v417 = vsel %vm170, %v412, 0
    %419 = vmatprep.subr.bf16.mxu0 0
    %420 = vmatpush1.bf16.xpose.msra.mxu0 %v417
    %421 = vmatprep.subr.bf16.mxu0 0
    %422 = vmatpush1.bf16.xpose.msra.mxu0 0
    %423 = vmatprep.subr.bf16.mxu0 0
    %424 = vmatpush1.bf16.xpose.msra.mxu0 0
    %425 = vmatprep.subr.bf16.mxu0 0
    %426 = vmatpush1.bf16.xpose.msra.mxu0 0
    %427 = vmatprep.subr.bf16.mxu0 0
    %428 = vmatpush1.bf16.xpose.msra.mxu0 0
    %429 = vmatprep.subr.bf16.mxu0 0
    %430 = vmatpush1.bf16.xpose.msra.mxu0 0
    %431 = vmatprep.subr.bf16.mxu0 0
    %432 = vmatpush1.bf16.xpose.msra.mxu0 0
    %433 = vmatprep.subr.bf16.mxu0 0
    %434 = vmatpush1.bf16.xpose.msra.mxu0 0
    %435 = vmatprep.subr.bf16.mxu0 0
    %436 = vmatpush1.bf16.xpose.msra.mxu0 0
    %437 = vmatprep.subr.bf16.mxu0 0
    %438 = vmatpush1.bf16.xpose.msra.mxu0 0
    %439 = vmatprep.subr.bf16.mxu0 0
    %440 = vmatpush1.bf16.xpose.msra.mxu0 0
    %441 = vmatprep.subr.bf16.mxu0 0
    %442 = vmatpush1.bf16.xpose.msra.mxu0 0
    %443 = vmatprep.subr.bf16.mxu0 0
    %444 = vmatpush1.bf16.xpose.msra.mxu0 0
    %445 = vmatprep.subr.bf16.mxu0 0
    %446 = vmatpush1.bf16.xpose.msra.mxu0 0
    %447 = vmatprep.subr.bf16.mxu0 0
    %448 = vmatpush1.bf16.xpose.msra.mxu0 0
    %449 = vmatprep.subr.bf16.mxu0 0
    %450 = vmatpush1.bf16.xpose.msra.mxu0 0
    %451 = vmatprep.mubr.bf16.mxu0 0
    %452 = vmatmul.mubr.bf16.gmra.mrb[0].mxu0 %v414
    %v453 = vpop.f32.mrb[0].mxu0
    %v454 = vadd.f32 %v25, %v453
    %v455 = vpop.f32.mrb[0].mxu0
    %v456 = vpop.f32.mrb[0].mxu0
    %v457 = vadd.f32 %v26, %v456
    %v458 = vpop.f32.mrb[0].mxu0
    %459 = vdwg.mxu0
    %v460 = vsel %vm218, %v454, -inf
    %461 = vmax.xlane.f32.xlu0 %v460
    %v462 = vpop.xlane.xlu0 %461
    %v463 = vsel %vm218, %v457, -inf
    %464 = vmax.xlane.f32.xlu0 %v463
    %v465 = vpop.xlane.xlu0 %464
    %v466 = vsub.f32 %v454, %v462
    %v467 = vsub.f32 %v457, %v465
    %v468 = vmul.f32 %v466, 1.442695
    %v469 = vpow.pop %v468
    %v470 = vmul.f32 %v467, 1.442695
    %v471 = vpow.pop %v470
    %v472 = vsel %vm218, %v469, 0.0
    %473 = vadd.xlane.f32.xlu0 %v472
    %v474 = vpop.xlane.xlu0 %473
    %v475 = vsel %vm218, %v471, 0.0
    %476 = vadd.xlane.f32.xlu0 %v475
    %v477 = vpop.xlane.xlu0 %476
    %v478 = vrcp.pop %v474
    %v479 = vrcp.pop %v477
    %v480 = vmul.f32 %v469, %v478
    %v481 = vmul.f32 %v471, %v479
    %v482 = vpack.c.bf16 %v481, %v480
    %v484 = vsel %vm218, %v482, 0
    %486 = vmatprep.subr.bf16.mxu0 0
    %487 = vmatpush1.bf16.msra.mxu0 %v409
    %488 = vmatprep.subr.bf16.mxu0 0
    %489 = vmatpush1.bf16.msra.mxu0 0
    %490 = vmatprep.subr.bf16.mxu0 0
    %491 = vmatpush1.bf16.msra.mxu0 0
    %492 = vmatprep.subr.bf16.mxu0 0
    %493 = vmatpush1.bf16.msra.mxu0 0
    %494 = vmatprep.subr.bf16.mxu0 0
    %495 = vmatpush1.bf16.msra.mxu0 0
    %496 = vmatprep.subr.bf16.mxu0 0
    %497 = vmatpush1.bf16.msra.mxu0 0
    %498 = vmatprep.subr.bf16.mxu0 0
    %499 = vmatpush1.bf16.msra.mxu0 0
    %500 = vmatprep.subr.bf16.mxu0 0
    %501 = vmatpush1.bf16.msra.mxu0 0
    %502 = vmatprep.subr.bf16.mxu0 0
    %503 = vmatpush1.bf16.msra.mxu0 0
    %504 = vmatprep.subr.bf16.mxu0 0
    %505 = vmatpush1.bf16.msra.mxu0 0
    %506 = vmatprep.subr.bf16.mxu0 0
    %507 = vmatpush1.bf16.msra.mxu0 0
    %508 = vmatprep.subr.bf16.mxu0 0
    %509 = vmatpush1.bf16.msra.mxu0 0
    %510 = vmatprep.subr.bf16.mxu0 0
    %511 = vmatpush1.bf16.msra.mxu0 0
    %512 = vmatprep.subr.bf16.mxu0 0
    %513 = vmatpush1.bf16.msra.mxu0 0
    %514 = vmatprep.subr.bf16.mxu0 0
    %515 = vmatpush1.bf16.msra.mxu0 0
    %516 = vmatprep.subr.bf16.mxu0 0
    %517 = vmatpush1.bf16.msra.mxu0 0
    %518 = vmatprep.mubr.bf16.mxu0 0
    %519 = vmatmul.mubr.bf16.gmra.mrb[0].mxu0 %v484
    %v520 = vpop.f32.mrb[0].mxu0
    %v521 = vadd.f32 0.0, %v520
    %v522 = vpop.f32.mrb[0].mxu0
    %v523 = vpop.f32.mrb[0].mxu0
    %v524 = vadd.f32 0.0, %v523
    %v525 = vpop.f32.mrb[0].mxu0
    %526 = vdwg.mxu0
    %527 = vrot.lane.b32.xlu0 %v408, 96
    %v528 = vpop.permute.xlu0 %527
    %529 = vrot.lane.b32.xlu0 %v408, 32
    %v530 = vpop.permute.xlu0 %529
    %v532 = vsel %vm170, %v528, 0
    %v535 = vsel %vm170, %v530, 0
    %537 = vmatprep.subr.bf16.mxu0 0
    %538 = vmatpush1.bf16.xpose.msra.mxu0 %v535
    %539 = vmatprep.subr.bf16.mxu0 0
    %540 = vmatpush1.bf16.xpose.msra.mxu0 0
    %541 = vmatprep.subr.bf16.mxu0 0
    %542 = vmatpush1.bf16.xpose.msra.mxu0 0
    %543 = vmatprep.subr.bf16.mxu0 0
    %544 = vmatpush1.bf16.xpose.msra.mxu0 0
    %545 = vmatprep.subr.bf16.mxu0 0
    %546 = vmatpush1.bf16.xpose.msra.mxu0 0
    %547 = vmatprep.subr.bf16.mxu0 0
    %548 = vmatpush1.bf16.xpose.msra.mxu0 0
    %549 = vmatprep.subr.bf16.mxu0 0
    %550 = vmatpush1.bf16.xpose.msra.mxu0 0
    %551 = vmatprep.subr.bf16.mxu0 0
    %552 = vmatpush1.bf16.xpose.msra.mxu0 0
    %553 = vmatprep.subr.bf16.mxu0 0
    %554 = vmatpush1.bf16.xpose.msra.mxu0 0
    %555 = vmatprep.subr.bf16.mxu0 0
    %556 = vmatpush1.bf16.xpose.msra.mxu0 0
    %557 = vmatprep.subr.bf16.mxu0 0
    %558 = vmatpush1.bf16.xpose.msra.mxu0 0
    %559 = vmatprep.subr.bf16.mxu0 0
    %560 = vmatpush1.bf16.xpose.msra.mxu0 0
    %561 = vmatprep.subr.bf16.mxu0 0
    %562 = vmatpush1.bf16.xpose.msra.mxu0 0
    %563 = vmatprep.subr.bf16.mxu0 0
    %564 = vmatpush1.bf16.xpose.msra.mxu0 0
    %565 = vmatprep.subr.bf16.mxu0 0
    %566 = vmatpush1.bf16.xpose.msra.mxu0 0
    %567 = vmatprep.subr.bf16.mxu0 0
    %568 = vmatpush1.bf16.xpose.msra.mxu0 0
    %569 = vmatprep.mubr.bf16.mxu0 0
    %570 = vmatmul.mubr.bf16.gmra.mrb[0].mxu0 %v532
    %v571 = vpop.f32.mrb[0].mxu0
    %v572 = vadd.f32 %v25, %v571
    %v573 = vpop.f32.mrb[0].mxu0
    %v574 = vpop.f32.mrb[0].mxu0
    %v575 = vadd.f32 %v26, %v574
    %v576 = vpop.f32.mrb[0].mxu0
    %577 = vdwg.mxu0
    %v578 = vsel %vm218, %v572, -inf
    %579 = vmax.xlane.f32.xlu0 %v578
    %v580 = vpop.xlane.xlu0 %579
    %v581 = vsel %vm218, %v575, -inf
    %582 = vmax.xlane.f32.xlu0 %v581
    %v583 = vpop.xlane.xlu0 %582
    %v584 = vsub.f32 %v572, %v580
    %v585 = vsub.f32 %v575, %v583
    %v586 = vmul.f32 %v584, 1.442695
    %v587 = vpow.pop %v586
    %v588 = vmul.f32 %v585, 1.442695
    %v589 = vpow.pop %v588
    %v590 = vsel %vm218, %v587, 0.0
    %591 = vadd.xlane.f32.xlu0 %v590
    %v592 = vpop.xlane.xlu0 %591
    %v593 = vsel %vm218, %v589, 0.0
    %594 = vadd.xlane.f32.xlu0 %v593
    %v595 = vpop.xlane.xlu0 %594
    %v596 = vrcp.pop %v592
    %v597 = vrcp.pop %v595
    %v598 = vmul.f32 %v587, %v596
    %v599 = vmul.f32 %v589, %v597
    %v600 = vpack.c.bf16 %v599, %v598
    %602 = vrot.lane.b32.xlu0 %v409, 96
    %v603 = vpop.permute.xlu0 %602
    %v606 = vsel %vm218, %v600, 0
    %608 = vmatprep.subr.bf16.mxu0 0
    %609 = vmatpush1.bf16.msra.mxu0 %v603
    %610 = vmatprep.subr.bf16.mxu0 0
    %611 = vmatpush1.bf16.msra.mxu0 0
    %612 = vmatprep.subr.bf16.mxu0 0
    %613 = vmatpush1.bf16.msra.mxu0 0
    %614 = vmatprep.subr.bf16.mxu0 0
    %615 = vmatpush1.bf16.msra.mxu0 0
    %616 = vmatprep.subr.bf16.mxu0 0
    %617 = vmatpush1.bf16.msra.mxu0 0
    %618 = vmatprep.subr.bf16.mxu0 0
    %619 = vmatpush1.bf16.msra.mxu0 0
    %620 = vmatprep.subr.bf16.mxu0 0
    %621 = vmatpush1.bf16.msra.mxu0 0
    %622 = vmatprep.subr.bf16.mxu0 0
    %623 = vmatpush1.bf16.msra.mxu0 0
    %624 = vmatprep.subr.bf16.mxu0 0
    %625 = vmatpush1.bf16.msra.mxu0 0
    %626 = vmatprep.subr.bf16.mxu0 0
    %627 = vmatpush1.bf16.msra.mxu0 0
    %628 = vmatprep.subr.bf16.mxu0 0
    %629 = vmatpush1.bf16.msra.mxu0 0
    %630 = vmatprep.subr.bf16.mxu0 0
    %631 = vmatpush1.bf16.msra.mxu0 0
    %632 = vmatprep.subr.bf16.mxu0 0
    %633 = vmatpush1.bf16.msra.mxu0 0
    %634 = vmatprep.subr.bf16.mxu0 0
    %635 = vmatpush1.bf16.msra.mxu0 0
    %636 = vmatprep.subr.bf16.mxu0 0
    %637 = vmatpush1.bf16.msra.mxu0 0
    %638 = vmatprep.subr.bf16.mxu0 0
    %639 = vmatpush1.bf16.msra.mxu0 0
    %640 = vmatprep.mubr.bf16.mxu0 0
    %641 = vmatmul.mubr.bf16.gmra.mrb[0].mxu0 %v606
    %v642 = vpop.f32.mrb[0].mxu0
    %v643 = vadd.f32 0.0, %v642
    %v644 = vpop.f32.mrb[0].mxu0
    %v645 = vpop.f32.mrb[0].mxu0
    %v646 = vadd.f32 0.0, %v645
    %v647 = vpop.f32.mrb[0].mxu0
    %648 = vdwg.mxu0
    %v649 = vpack.c.bf16 %v283, %v280
    %v650 = vpack.c.bf16 %v524, %v521
    %v655 = vunpack.c.l.b16 %v35
    %v656 = vunpack.c.l.b16 %v36
    %v657 = vunpack.c.l.b16 %v37
    %v658 = vunpack.c.l.b16 %v38
    %v659 = vpack.c.b16 %v656, %v655
    %v660 = vpack.c.b16 %v658, %v657
    %v664 = vsel %vm170, %v649, 0
    %v667 = vsel %vm170, %v650, 0
    %669 = vmatprep.subr.bf16.mxu0 0
    %670 = vmatpush1.bf16.msra.mxu0 %v659
    %671 = vmatprep.subr.bf16.mxu0 0
    %672 = vmatpush1.bf16.msra.mxu0 %v660
    %673 = vmatprep.subr.bf16.mxu0 0
    %674 = vmatpush1.bf16.msra.mxu0 0
    %675 = vmatprep.subr.bf16.mxu0 0
    %676 = vmatpush1.bf16.msra.mxu0 0
    %677 = vmatprep.subr.bf16.mxu0 0
    %678 = vmatpush1.bf16.msra.mxu0 0
    %679 = vmatprep.subr.bf16.mxu0 0
    %680 = vmatpush1.bf16.msra.mxu0 0
    %681 = vmatprep.subr.bf16.mxu0 0
    %682 = vmatpush1.bf16.msra.mxu0 0
    %683 = vmatprep.subr.bf16.mxu0 0
    %684 = vmatpush1.bf16.msra.mxu0 0
    %685 = vmatprep.subr.bf16.mxu0 0
    %686 = vmatpush1.bf16.msra.mxu0 0
    %687 = vmatprep.subr.bf16.mxu0 0
    %688 = vmatpush1.bf16.msra.mxu0 0
    %689 = vmatprep.subr.bf16.mxu0 0
    %690 = vmatpush1.bf16.msra.mxu0 0
    %691 = vmatprep.subr.bf16.mxu0 0
    %692 = vmatpush1.bf16.msra.mxu0 0
    %693 = vmatprep.subr.bf16.mxu0 0
    %694 = vmatpush1.bf16.msra.mxu0 0
    %695 = vmatprep.subr.bf16.mxu0 0
    %696 = vmatpush1.bf16.msra.mxu0 0
    %697 = vmatprep.subr.bf16.mxu0 0
    %698 = vmatpush1.bf16.msra.mxu0 0
    %699 = vmatprep.subr.bf16.mxu0 0
    %700 = vmatpush1.bf16.msra.mxu0 0
    %701 = vmatprep.mubr.bf16.mxu0 0
    %702 = vmatmul.mubr.bf16.gmra.mrb[0].mxu0 %v664
    %v703 = vpop.f32.mrb[0].mxu0
    %v704 = vadd.f32 0.0, %v703
    %v705 = vpop.f32.mrb[0].mxu0
    %v706 = vpop.f32.mrb[0].mxu0
    %v707 = vadd.f32 0.0, %v706
    %v708 = vpop.f32.mrb[0].mxu0
    %709 = vmatprep.mubr.bf16.mxu0 0
    %710 = vmatmul.mubr.bf16.gmra.mrb[0].mxu0 %v667
    %v711 = vpop.f32.mrb[0].mxu0
    %v712 = vadd.f32 0.0, %v711
    %v713 = vpop.f32.mrb[0].mxu0
    %v714 = vpop.f32.mrb[0].mxu0
    %v715 = vadd.f32 0.0, %v714
    %v716 = vpop.f32.mrb[0].mxu0
    %717 = vdwg.mxu0
    %v718 = vlaneseq
    %v719 = vshrl.u32 %v718, 7
    %v720 = vsub.s32 1, %v719
    %v721 = vrot.slane %v43, %v720
    %v722 = vadd.f32 %v721, %v704
    %v723 = vadd.f32 %v721, %v707
    %v724 = vadd.f32 %v721, %v712
    %v725 = vadd.f32 %v721, %v715
    %v726 = vpack.c.bf16 %v405, %v402
    %v727 = vpack.c.bf16 %v646, %v643
    %v732 = vunpack.c.l.b16 %v39
    %v733 = vunpack.c.l.b16 %v40
    %v734 = vunpack.c.l.b16 %v41
    %v735 = vunpack.c.l.b16 %v42
    %v736 = vpack.c.b16 %v733, %v732
    %v737 = vpack.c.b16 %v735, %v734
    %v741 = vsel %vm170, %v726, 0
    %v744 = vsel %vm170, %v727, 0
    %746 = vmatprep.subr.bf16.mxu0 0
    %747 = vmatpush1.bf16.msra.mxu0 %v736
    %748 = vmatprep.subr.bf16.mxu0 0
    %749 = vmatpush1.bf16.msra.mxu0 %v737
    %750 = vmatprep.subr.bf16.mxu0 0
    %751 = vmatpush1.bf16.msra.mxu0 0
    %752 = vmatprep.subr.bf16.mxu0 0
    %753 = vmatpush1.bf16.msra.mxu0 0
    %754 = vmatprep.subr.bf16.mxu0 0
    %755 = vmatpush1.bf16.msra.mxu0 0
    %756 = vmatprep.subr.bf16.mxu0 0
    %757 = vmatpush1.bf16.msra.mxu0 0
    %758 = vmatprep.subr.bf16.mxu0 0
    %759 = vmatpush1.bf16.msra.mxu0 0
    %760 = vmatprep.subr.bf16.mxu0 0
    %761 = vmatpush1.bf16.msra.mxu0 0
    %762 = vmatprep.subr.bf16.mxu0 0
    %763 = vmatpush1.bf16.msra.mxu0 0
    %764 = vmatprep.subr.bf16.mxu0 0
    %765 = vmatpush1.bf16.msra.mxu0 0
    %766 = vmatprep.subr.bf16.mxu0 0
    %767 = vmatpush1.bf16.msra.mxu0 0
    %768 = vmatprep.subr.bf16.mxu0 0
    %769 = vmatpush1.bf16.msra.mxu0 0
    %770 = vmatprep.subr.bf16.mxu0 0
    %771 = vmatpush1.bf16.msra.mxu0 0
    %772 = vmatprep.subr.bf16.mxu0 0
    %773 = vmatpush1.bf16.msra.mxu0 0
    %774 = vmatprep.subr.bf16.mxu0 0
    %775 = vmatpush1.bf16.msra.mxu0 0
    %776 = vmatprep.subr.bf16.mxu0 0
    %777 = vmatpush1.bf16.msra.mxu0 0
    %778 = vmatprep.mubr.bf16.mxu0 0
    %779 = vmatmul.mubr.bf16.gmra.mrb[0].mxu0 %v741
    %v780 = vpop.f32.mrb[0].mxu0
    %v781 = vadd.f32 0.0, %v780
    %v782 = vpop.f32.mrb[0].mxu0
    %v783 = vpop.f32.mrb[0].mxu0
    %v784 = vadd.f32 0.0, %v783
    %v785 = vpop.f32.mrb[0].mxu0
    %786 = vmatprep.mubr.bf16.mxu0 0
    %787 = vmatmul.mubr.bf16.gmra.mrb[0].mxu0 %v744
    %v788 = vpop.f32.mrb[0].mxu0
    %v789 = vadd.f32 0.0, %v788
    %v790 = vpop.f32.mrb[0].mxu0
    %v791 = vpop.f32.mrb[0].mxu0
    %v792 = vadd.f32 0.0, %v791
    %v793 = vpop.f32.mrb[0].mxu0
    %794 = vdwg.mxu0
    %v795 = vadd.f32 %v722, %v781
    %v796 = vadd.f32 %v723, %v784
    %v797 = vadd.f32 %v724, %v789
    %v798 = vadd.f32 %v725, %v792
    %v799 = vadd.f32 %v795, %v19
    %v800 = vadd.f32 %v796, %v20
    %v801 = vadd.f32 %v797, %v21
    %v802 = vadd.f32 %v798, %v22
    %v803 = vsel %vm105, %v799, 0.0
    %804 = vadd.xlane.f32.xlu0 %v803
    %v805 = vpop.xlane.xlu0 %804
    %v806 = vsel %vm105, %v800, 0.0
    %807 = vadd.xlane.f32.xlu0 %v806
    %v808 = vpop.xlane.xlu0 %807
    %v809 = vsel %vm105, %v801, 0.0
    %810 = vadd.xlane.f32.xlu0 %v809
    %v811 = vpop.xlane.xlu0 %810
    %v812 = vsel %vm105, %v802, 0.0
    %813 = vadd.xlane.f32.xlu0 %v812
    %v814 = vpop.xlane.xlu0 %813
    %v815 = vrcp.pop 64.0
    %v816 = vmul.f32 %v805, %v815
    %v817 = vmul.f32 %v808, %v815
    %v818 = vmul.f32 %v811, %v815
    %v819 = vmul.f32 %v814, %v815
    %v820 = vsub.f32 %v799, %v816
    %v821 = vsub.f32 %v800, %v817
    %v822 = vsub.f32 %v801, %v818
    %v823 = vsub.f32 %v802, %v819
    %v824 = vmul.f32 %v820, %v820
    %v825 = vmul.f32 %v821, %v821
    %v826 = vmul.f32 %v822, %v822
    %v827 = vmul.f32 %v823, %v823
    %v828 = vsel %vm105, %v824, 0.0
    %829 = vadd.xlane.f32.xlu0 %v828
    %v830 = vpop.xlane.xlu0 %829
    %v831 = vsel %vm105, %v825, 0.0
    %832 = vadd.xlane.f32.xlu0 %v831
    %v833 = vpop.xlane.xlu0 %832
    %v834 = vsel %vm105, %v826, 0.0
    %835 = vadd.xlane.f32.xlu0 %v834
    %v836 = vpop.xlane.xlu0 %835
    %v837 = vsel %vm105, %v827, 0.0
    %838 = vadd.xlane.f32.xlu0 %v837
    %v839 = vpop.xlane.xlu0 %838
    %v840 = vmul.f32 %v830, %v815
    %v841 = vmul.f32 %v833, %v815
    %v842 = vmul.f32 %v836, %v815
    %v843 = vmul.f32 %v839, %v815
    %v844 = vadd.f32 %v840, 1e-12
    %v845 = vadd.f32 %v841, 1e-12
    %v846 = vadd.f32 %v842, 1e-12
    %v847 = vadd.f32 %v843, 1e-12
    %v848 = vrsqrt.pop %v844
    %v849 = vrsqrt.pop %v845
    %v850 = vrsqrt.pop %v846
    %v851 = vrsqrt.pop %v847
    %v852 = vmul.f32 %v820, %v848
    %v853 = vmul.f32 %v821, %v849
    %v854 = vmul.f32 %v822, %v850
    %v855 = vmul.f32 %v823, %v851
    %v856 = vlaneseq
    %v857 = vshrl.u32 %v856, 7
    %v858 = vsub.s32 2, %v857
    %v859 = vrot.slane %v43, %v858
    %v860 = vmul.f32 %v852, %v859
    %v861 = vmul.f32 %v853, %v859
    %v862 = vmul.f32 %v854, %v859
    %v863 = vmul.f32 %v855, %v859
    %v864 = vlaneseq
    %v865 = vshrl.u32 %v864, 7
    %v866 = vsub.s32 3, %v865
    %v867 = vrot.slane %v43, %v866
    %v868 = vadd.f32 %v860, %v867
    %v869 = vadd.f32 %v861, %v867
    %v870 = vadd.f32 %v862, %v867
    %v871 = vadd.f32 %v863, %v867
    %872 = vst.msk [vmem:[#allocation2] sm:$0xff] %vm105, %v868
    %873 = vst.msk [vmem:[#allocation2 + $0x8] sm:$0xff] %vm105, %v869
    %874 = vst.msk [vmem:[#allocation2 + $0x10] sm:$0xff] %vm105, %v870
    %875 = vst.msk [vmem:[#allocation2 + $0x18] sm:$0xff] %vm105, %v871
    // Predicated region
    $region18: #{tpu_custom_call.1} parent=1 // pred_check
      _
    $region19: #{tpu_custom_call.1} parent=1 // pred_check_branch
      %877 = sbr.rel (0) target = $region21
    $region20: #{tpu_custom_call.1} parent=1 // pred_region
      %s879 = ssub.s32 512, 512
      %880 = vsyncadd [#allocation3], %s879
      %s881 = sshll.u32 [#allocation2], 4
      %s882 = int_to_ptr.vmem [resolvable:$true] %s881
      %887 = dma.vmem_to_hbm [thread:$0]  %s882, 512, %s4, [#allocation3], 128, 128, 8
    $region21: #{tpu_custom_call.1} parent=1 // pred_fallthru
      _
    // Predicated region
    $region22: #{tpu_custom_call.1} parent=1 // pred_check
      _
    $region23: #{tpu_custom_call.1} parent=1 // pred_check_branch
      %889 = sbr.rel (0) target = $region25
    $region24: #{tpu_custom_call.1} parent=1 // pred_region
      %890 = dma.done [#allocation3], 512
    $region25: #{tpu_custom_call.1} parent=1 // pred_fallthru
      _
    %891 = vsyncpa [#allocation3], 1

</llo_original>
